<compile_context>
chip_gen: v5e
topology: v5e:2x2
jax: 0.10.0
libtpu: 0.0.40
codegen_flags: <defaults>
</compile_context>

<pallas_src>
import functools

import jax
import jax.numpy as jnp
from jax.experimental import pallas as pl
from jax.experimental.pallas import tpu as pltpu


# --- exact-erf GELU (PyTorch nn.GELU default) via A&S 7.1.26 polynomial -----
_A1, _A2, _A3, _A4, _A5 = (0.254829592, -0.284496736, 1.421413741,
                           -1.453152027, 1.061405429)
_P = 0.3275911
_INV_SQRT2 = 0.7071067811865476


def _erf_approx(x):
    ax = jnp.abs(x)
    t = 1.0 / (1.0 + _P * ax)
    poly = ((((_A5 * t + _A4) * t + _A3) * t + _A2) * t + _A1) * t
    y = 1.0 - poly * jnp.exp(-ax * ax)
    return jnp.where(x >= 0, y, -y)


def _gelu_erf(x):
    return 0.5 * x * (1.0 + _erf_approx(x * _INV_SQRT2))


# --- kernel ------------------------------------------------------------------
def _gdfn_kernel(x_ref, gamma_ref, beta_ref, masks_ref, w_in_ref, dw_ref,
                 w_out_ref, o_ref, xn_ref, *, H, W, eps, tch):
    j = pl.program_id(1)            # channel-tile index (inner, "arbitrary")
    HW = H * W

    # LayerNorm (channels_first) once per image; stash normalized input and
    # zero the resident output accumulator block.
    @pl.when(j == 0)
    def _():
        x = x_ref[0].astype(jnp.float32)                       # (C, HW)
        u = jnp.mean(x, axis=0, keepdims=True)
        d = x - u
        s = jnp.mean(d * d, axis=0, keepdims=True)
        xn_ref[...] = gamma_ref[...] * (d * jax.lax.rsqrt(s + eps)) + beta_ref[...]
        o_ref[...] = jnp.zeros(o_ref.shape, o_ref.dtype)

    xn = xn_ref[...]                                           # (C, HW) f32
    C = xn.shape[0]
    rows = 2 * tch

    # project_in for this channel tile; both gate halves fused in one array.
    w_in = w_in_ref[0]                                         # (2*tch, C)
    if C >= 32:
        y = jnp.dot(w_in, xn, preferred_element_type=jnp.float32)      # MXU
    else:
        y = jnp.zeros((rows, HW), jnp.float32)                 # VPU outer prod
        for c in range(C):
            y = y + w_in[:, c:c + 1] * xn[c:c + 1, :]

    # Depthwise 3x3 conv (padding=1) on the flattened lane axis, fused halves.
    dw = dw_ref[0]                                             # (2*tch, 9)
    masks = masks_ref[...]                                     # (9, HW) f32
    z = jnp.zeros((rows, HW), jnp.float32)
    k = 0
    for dy in (-1, 0, 1):
        for dx in (-1, 0, 1):
            off = dy * W + dx
            if off == 0:
                t = y                                          # center: no mask
            else:
                t = pltpu.roll(y, shift=(-off) % HW, axis=1)   # XLU rotate
                t = t * masks[k:k + 1, :]                      # border mask
            z = z + t * dw[:, k:k + 1]
            k += 1

    # GELU (erf) gate: first tch channels gate the paired second tch channels.
    g = _gelu_erf(z[:tch, :]) * z[tch:, :]                     # (tch, HW)

    # project_out partial contribution, accumulated into the resident output.
    w_out = w_out_ref[0]                                       # (C, tch)
    if tch >= 32:
        acc = jnp.dot(w_out, g, preferred_element_type=jnp.float32)    # MXU
    else:
        acc = jnp.zeros((C, HW), jnp.float32)
        for t_ in range(tch):
            acc = acc + w_out[:, t_:t_ + 1] * g[t_:t_ + 1, :]
    o_ref[0] = o_ref[0] + acc.astype(o_ref.dtype)


# --- wrapper -----------------------------------------------------------------
def _pick_channel_tile(hidden, HW, vmem_budget_bytes):
    """Largest channel chunk whose ~6 live (2*tch, HW) f32 intermediates fit the
    budget, while still giving the pipeline more than one step per image."""
    row_bytes = HW * 4
    max_tch = max(1, int(vmem_budget_bytes // (12 * row_bytes)))
    tch = max(1, min(hidden, max_tch))
    if hidden > 1:
        tch = min(tch, pl.cdiv(hidden, 2))     # >= 2 channel tiles per image
    return tch


def gated_dconv_feedforward(x, gamma, beta, w_in, w_dw, w_out, eps=1e-6):
    """x: (B, C, H, W).  gamma/beta: (C,) LayerNorm params.
    w_in: (2*hidden, C) project_in 1x1 weight, w_dw: (2*hidden, 3, 3) depthwise
    weight, w_out: (C, hidden) project_out 1x1 weight."""
    B, C, H, W = x.shape
    hidden = w_in.shape[0] // 2
    HW = H * W
    f32 = jnp.float32

    # Generation-aware VMEM budget (v5e/v6e: 128 MiB, v7x: 64 MiB per core).
    try:
        info = pltpu.get_tpu_info()
        vmem_cap = int(getattr(info, "vmem_capacity_bytes", 64 * 1024 * 1024))
    except Exception:
        vmem_cap = 64 * 1024 * 1024
    vmem_limit = max(32 * 1024 * 1024,
                     min(int(vmem_cap * 3 // 4), 100 * 1024 * 1024))

    tch = _pick_channel_tile(hidden, HW, vmem_cap // 4)
    n_ch = pl.cdiv(hidden, tch)
    hidden_p = n_ch * tch
    pad = hidden_p - hidden

    # Arrange per-tile weights so tile j carries the paired gate halves
    # [j*tch:(j+1)*tch) and [hidden + j*tch : hidden + (j+1)*tch).
    w_in1 = w_in[:hidden].astype(f32)
    w_in2 = w_in[hidden:].astype(f32)
    dw1 = w_dw[:hidden].reshape(hidden, 9).astype(f32)
    dw2 = w_dw[hidden:].reshape(hidden, 9).astype(f32)
    w_out_p = w_out.astype(f32)
    if pad:
        zc = jnp.zeros((pad, C), f32)
        z9 = jnp.zeros((pad, 9), f32)
        w_in1 = jnp.concatenate([w_in1, zc], 0)
        w_in2 = jnp.concatenate([w_in2, zc], 0)
        dw1 = jnp.concatenate([dw1, z9], 0)
        dw2 = jnp.concatenate([dw2, z9], 0)
        w_out_p = jnp.concatenate([w_out_p, jnp.zeros((C, pad), f32)], 1)
    w_in_t = jnp.concatenate([w_in1.reshape(n_ch, tch, C),
                              w_in2.reshape(n_ch, tch, C)], axis=1)   # (n_ch, 2t, C)
    dw_t = jnp.concatenate([dw1.reshape(n_ch, tch, 9),
                            dw2.reshape(n_ch, tch, 9)], axis=1)       # (n_ch, 2t, 9)
    w_out_t = jnp.transpose(w_out_p.reshape(C, n_ch, tch), (1, 0, 2)) # (n_ch, C, t)

    # Precompute the 9 depthwise-conv border masks once (constant input).
    pos = jnp.arange(HW, dtype=jnp.int32)
    hh = pos // W
    ww = pos % W
    mrows = []
    for dy in (-1, 0, 1):
        for dx in (-1, 0, 1):
            mrows.append((hh + dy >= 0) & (hh + dy < H) &
                         (ww + dx >= 0) & (ww + dx < W))
    masks = jnp.stack(mrows, 0).astype(f32)                    # (9, HW)

    x_flat = x.reshape(B, C, HW)                               # lane-dense
    gamma2 = gamma.reshape(C, 1).astype(f32)
    beta2 = beta.reshape(C, 1).astype(f32)

    kernel = functools.partial(_gdfn_kernel, H=H, W=W, eps=eps, tch=tch)

    out_flat = pl.pallas_call(
        kernel,
        out_shape=jax.ShapeDtypeStruct((B, C, HW), x.dtype),
        grid_spec=pltpu.PrefetchScalarGridSpec(
            num_scalar_prefetch=0,
            grid=(B, n_ch),
            in_specs=[
                pl.BlockSpec((1, C, HW), lambda b, j: (b, 0, 0)),       # x (resident over j)
                pl.BlockSpec((C, 1), lambda b, j: (0, 0)),              # gamma
                pl.BlockSpec((C, 1), lambda b, j: (0, 0)),              # beta
                pl.BlockSpec((9, HW), lambda b, j: (0, 0)),             # tap masks
                pl.BlockSpec((1, 2 * tch, C), lambda b, j: (j, 0, 0)),  # project_in tile
                pl.BlockSpec((1, 2 * tch, 9), lambda b, j: (j, 0, 0)),  # dwconv tile
                pl.BlockSpec((1, C, tch), lambda b, j: (j, 0, 0)),      # project_out tile
            ],
            out_specs=pl.BlockSpec((1, C, HW), lambda b, j: (b, 0, 0)), # accumulator
            scratch_shapes=[pltpu.VMEM((C, HW), jnp.float32)],          # LayerNorm(x)
        ),
        compiler_params=pltpu.CompilerParams(
            dimension_semantics=("parallel", "arbitrary"),
            vmem_limit_bytes=vmem_limit,
        ),
    )(x_flat, gamma2, beta2, masks, w_in_t, dw_t, w_out_t)

    return out_flat.reshape(B, C, H, W)


# --- pure-JAX reference (mirrors the PyTorch forward, exact-erf GELU) --------
def _reference(x, gamma, beta, w_in, w_dw, w_out, eps=1e-6):
    B, C, H, W = x.shape
    hidden = w_in.shape[0] // 2
    u = jnp.mean(x, axis=1, keepdims=True)
    d = x - u
    s = jnp.mean(d * d, axis=1, keepdims=True)
    xn = d / jnp.sqrt(s + eps)
    xn = gamma[None, :, None, None] * xn + beta[None, :, None, None]
    y = jnp.einsum('oc,bchw->bohw', w_in, xn)
    yp = jnp.pad(y, ((0, 0), (0, 0), (1, 1), (1, 1)))
    z = jnp.zeros_like(y)
    for dy in range(3):
        for dx in range(3):
            z = z + yp[:, :, dy:dy + H, dx:dx + W] * w_dw[None, :, dy, dx, None, None]
    z1, z2 = z[:, :hidden], z[:, hidden:]
    g = jax.nn.gelu(z1, approximate=False) * z2
    return jnp.einsum('oh,bhxy->boxy', w_out, g)


if __name__ == "__main__":
    B, dim, H, W = 2, 4, 16, 16
    ffn_expansion_factor = 2.66
    hidden = int(dim * ffn_expansion_factor)        # 10

    key = jax.random.PRNGKey(0)
    k1, k2, k3, k4, k5, k6 = jax.random.split(key, 6)
    x = jax.random.normal(k1, (B, dim, H, W), jnp.float32)
    gamma = 1.0 + 0.1 * jax.random.normal(k2, (dim,), jnp.float32)       # norm.weight
    beta = 0.1 * jax.random.normal(k3, (dim,), jnp.float32)              # norm.bias
    w_in = 0.2 * jax.random.normal(k4, (2 * hidden, dim), jnp.float32)   # project_in
    w_dw = 0.2 * jax.random.normal(k5, (2 * hidden, 3, 3), jnp.float32)  # dwconv
    w_out = 0.2 * jax.random.normal(k6, (dim, hidden), jnp.float32)      # project_out

    y = gated_dconv_feedforward(x, gamma, beta, w_in, w_dw, w_out)
    jax.block_until_ready(y)

    y_ref = _reference(x, gamma, beta, w_in, w_dw, w_out)
    assert y.shape == x.shape
    err = float(jnp.max(jnp.abs(y - y_ref)))
    assert err < 1e-4, f"max abs error {err}"

    print("KERNEL_OK")
</pallas_src>

<mosaic_0001>
module attributes {stable_mosaic.version = 11 : i64} {
  func.func @_gdfn_kernel(%arg0: i32, %arg1: i32, %arg2: memref<1x4x256xf32, #tpu.memory_space<vmem>>, %arg3: memref<4x1xf32, #tpu.memory_space<vmem>>, %arg4: memref<4x1xf32, #tpu.memory_space<vmem>>, %arg5: memref<9x256xf32, #tpu.memory_space<vmem>>, %arg6: memref<1x10x4xf32, #tpu.memory_space<vmem>>, %arg7: memref<1x10x9xf32, #tpu.memory_space<vmem>>, %arg8: memref<1x4x5xf32, #tpu.memory_space<vmem>>, %arg9: memref<1x4x256xf32, #tpu.memory_space<vmem>>, %arg10: memref<4x256xf32, #tpu.memory_space<vmem>>) attributes {dimension_semantics = [#tpu.dimension_semantics<parallel>, #tpu.dimension_semantics<arbitrary>], iteration_bounds = array<i64: 2, 2>, scalar_prefetch = 0 : i64, scratch_operands = 1 : i64, tpu.core_type = #tpu.core_type<tc>, window_params = [{transform_indices = @transform_0, window_bounds = array<i64: 1, 4, 256>}, {pipeline_mode = #tpu.pipeline_mode<synchronous>, transform_indices = @transform_1, window_bounds = array<i64: 4, 1>}, {pipeline_mode = #tpu.pipeline_mode<synchronous>, transform_indices = @transform_2, window_bounds = array<i64: 4, 1>}, {pipeline_mode = #tpu.pipeline_mode<synchronous>, transform_indices = @transform_3, window_bounds = array<i64: 9, 256>}, {transform_indices = @transform_4, window_bounds = array<i64: 1, 10, 4>}, {transform_indices = @transform_5, window_bounds = array<i64: 1, 10, 9>}, {transform_indices = @transform_6, window_bounds = array<i64: 1, 4, 5>}, {transform_indices = @transform_7, window_bounds = array<i64: 1, 4, 256>}]} {
    %c0_i32 = arith.constant 0 : i32
    %0 = arith.cmpi eq, %arg1, %c0_i32 : i32
    %1 = arith.extui %0 : i1 to i32
    %c0_i32_0 = arith.constant 0 : i32
    %2 = arith.cmpi ne, %1, %c0_i32_0 : i32
    scf.if %2 {
      %c0_36 = arith.constant 0 : index
      %c0_37 = arith.constant 0 : index
      %c0_38 = arith.constant 0 : index
      %185 = vector.load %arg2[%c0_36, %c0_37, %c0_38] : memref<1x4x256xf32, #tpu.memory_space<vmem>>, vector<1x4x256xf32>
      %186 = vector.shape_cast %185 : vector<1x4x256xf32> to vector<4x256xf32>
      %cst_39 = arith.constant dense<0.000000e+00> : vector<256xf32>
      %187 = vector.multi_reduction <add>, %186, %cst_39 [0] : vector<4x256xf32> to vector<256xf32>
      %188 = vector.shape_cast %187 : vector<256xf32> to vector<1x256xf32>
      %cst_40 = arith.constant 4.000000e+00 : f32
      %189 = vector.broadcast %cst_40 : f32 to vector<1x256xf32>
      %190 = arith.divf %188, %189 : vector<1x256xf32>
      %191 = vector.broadcast %190 : vector<1x256xf32> to vector<4x256xf32>
      %192 = arith.subf %186, %191 : vector<4x256xf32>
      %193 = arith.mulf %192, %192 : vector<4x256xf32>
      %cst_41 = arith.constant dense<0.000000e+00> : vector<256xf32>
      %194 = vector.multi_reduction <add>, %193, %cst_41 [0] : vector<4x256xf32> to vector<256xf32>
      %195 = vector.shape_cast %194 : vector<256xf32> to vector<1x256xf32>
      %cst_42 = arith.constant 4.000000e+00 : f32
      %196 = vector.broadcast %cst_42 : f32 to vector<1x256xf32>
      %197 = arith.divf %195, %196 : vector<1x256xf32>
      %c0_43 = arith.constant 0 : index
      %c0_44 = arith.constant 0 : index
      %198 = vector.load %arg3[%c0_43, %c0_44] : memref<4x1xf32, #tpu.memory_space<vmem>>, vector<4x1xf32>
      %cst_45 = arith.constant 9.99999997E-7 : f32
      %199 = vector.broadcast %cst_45 : f32 to vector<1x256xf32>
      %200 = arith.addf %197, %199 : vector<1x256xf32>
      %201 = math.rsqrt %200 : vector<1x256xf32>
      %202 = vector.broadcast %201 : vector<1x256xf32> to vector<4x256xf32>
      %203 = arith.mulf %192, %202 : vector<4x256xf32>
      %204 = vector.broadcast %198 : vector<4x1xf32> to vector<4x256xf32>
      %205 = arith.mulf %204, %203 : vector<4x256xf32>
      %c0_46 = arith.constant 0 : index
      %c0_47 = arith.constant 0 : index
      %206 = vector.load %arg4[%c0_46, %c0_47] : memref<4x1xf32, #tpu.memory_space<vmem>>, vector<4x1xf32>
      %207 = vector.broadcast %206 : vector<4x1xf32> to vector<4x256xf32>
      %208 = arith.addf %205, %207 : vector<4x256xf32>
      %c0_48 = arith.constant 0 : index
      %c0_49 = arith.constant 0 : index
      %209 = vector.load %arg10[%c0_48, %c0_49] : memref<4x256xf32, #tpu.memory_space<vmem>>, vector<4x256xf32>
      tpu.vector_store %arg10[%c0_48, %c0_49], %208 {strides = array<i32>} : memref<4x256xf32, #tpu.memory_space<vmem>>, vector<4x256xf32>,
      %cst_50 = arith.constant 0.000000e+00 : f32
      %210 = vector.broadcast %cst_50 : f32 to vector<1x4x256xf32>
      %c0_51 = arith.constant 0 : index
      %c0_52 = arith.constant 0 : index
      %c0_53 = arith.constant 0 : index
      %211 = vector.load %arg9[%c0_51, %c0_52, %c0_53] : memref<1x4x256xf32, #tpu.memory_space<vmem>>, vector<1x4x256xf32>
      tpu.vector_store %arg9[%c0_51, %c0_52, %c0_53], %210 {strides = array<i32>} : memref<1x4x256xf32, #tpu.memory_space<vmem>>, vector<1x4x256xf32>,
    } else {
    }
    %c0 = arith.constant 0 : index
    %c0_1 = arith.constant 0 : index
    %3 = vector.load %arg10[%c0, %c0_1] : memref<4x256xf32, #tpu.memory_space<vmem>>, vector<4x256xf32>
    %c0_2 = arith.constant 0 : index
    %c0_3 = arith.constant 0 : index
    %c0_4 = arith.constant 0 : index
    %4 = vector.load %arg6[%c0_2, %c0_3, %c0_4] : memref<1x10x4xf32, #tpu.memory_space<vmem>>, vector<1x10x4xf32>
    %5 = vector.shape_cast %4 : vector<1x10x4xf32> to vector<10x4xf32>
    %cst = arith.constant 0.000000e+00 : f32
    %6 = vector.broadcast %cst : f32 to vector<10x256xf32>
    %7 = vector.extract_strided_slice %5 {offsets = [0, 0], sizes = [10, 1], strides = [1, 1]} : vector<10x4xf32> to vector<10x1xf32>
    %8 = vector.extract_strided_slice %3 {offsets = [0, 0], sizes = [1, 256], strides = [1, 1]} : vector<4x256xf32> to vector<1x256xf32>
    %9 = vector.broadcast %7 : vector<10x1xf32> to vector<10x256xf32>
    %10 = vector.broadcast %8 : vector<1x256xf32> to vector<10x256xf32>
    %11 = arith.mulf %9, %10 : vector<10x256xf32>
    %12 = arith.addf %6, %11 : vector<10x256xf32>
    %13 = vector.extract_strided_slice %5 {offsets = [0, 1], sizes = [10, 1], strides = [1, 1]} : vector<10x4xf32> to vector<10x1xf32>
    %14 = vector.extract_strided_slice %3 {offsets = [1, 0], sizes = [1, 256], strides = [1, 1]} : vector<4x256xf32> to vector<1x256xf32>
    %15 = vector.broadcast %13 : vector<10x1xf32> to vector<10x256xf32>
    %16 = vector.broadcast %14 : vector<1x256xf32> to vector<10x256xf32>
    %17 = arith.mulf %15, %16 : vector<10x256xf32>
    %18 = arith.addf %12, %17 : vector<10x256xf32>
    %19 = vector.extract_strided_slice %5 {offsets = [0, 2], sizes = [10, 1], strides = [1, 1]} : vector<10x4xf32> to vector<10x1xf32>
    %20 = vector.extract_strided_slice %3 {offsets = [2, 0], sizes = [1, 256], strides = [1, 1]} : vector<4x256xf32> to vector<1x256xf32>
    %21 = vector.broadcast %19 : vector<10x1xf32> to vector<10x256xf32>
    %22 = vector.broadcast %20 : vector<1x256xf32> to vector<10x256xf32>
    %23 = arith.mulf %21, %22 : vector<10x256xf32>
    %24 = arith.addf %18, %23 : vector<10x256xf32>
    %25 = vector.extract_strided_slice %5 {offsets = [0, 3], sizes = [10, 1], strides = [1, 1]} : vector<10x4xf32> to vector<10x1xf32>
    %26 = vector.extract_strided_slice %3 {offsets = [3, 0], sizes = [1, 256], strides = [1, 1]} : vector<4x256xf32> to vector<1x256xf32>
    %27 = vector.broadcast %25 : vector<10x1xf32> to vector<10x256xf32>
    %28 = vector.broadcast %26 : vector<1x256xf32> to vector<10x256xf32>
    %29 = arith.mulf %27, %28 : vector<10x256xf32>
    %30 = arith.addf %24, %29 : vector<10x256xf32>
    %c0_5 = arith.constant 0 : index
    %c0_6 = arith.constant 0 : index
    %c0_7 = arith.constant 0 : index
    %31 = vector.load %arg7[%c0_5, %c0_6, %c0_7] : memref<1x10x9xf32, #tpu.memory_space<vmem>>, vector<1x10x9xf32>
    %32 = vector.shape_cast %31 : vector<1x10x9xf32> to vector<10x9xf32>
    %c0_8 = arith.constant 0 : index
    %c0_9 = arith.constant 0 : index
    %33 = vector.load %arg5[%c0_8, %c0_9] : memref<9x256xf32, #tpu.memory_space<vmem>>, vector<9x256xf32>
    %cst_10 = arith.constant 0.000000e+00 : f32
    %34 = vector.broadcast %cst_10 : f32 to vector<10x256xf32>
    %c17_i32 = arith.constant 17 : i32
    %35 = tpu.dynamic_rotate %30 by %c17_i32 dim 1 : vector<10x256xf32>, i32 -> vector<10x256xf32>
    %36 = vector.extract_strided_slice %33 {offsets = [0, 0], sizes = [1, 256], strides = [1, 1]} : vector<9x256xf32> to vector<1x256xf32>
    %37 = vector.broadcast %36 : vector<1x256xf32> to vector<10x256xf32>
    %38 = arith.mulf %35, %37 : vector<10x256xf32>
    %39 = vector.extract_strided_slice %32 {offsets = [0, 0], sizes = [10, 1], strides = [1, 1]} : vector<10x9xf32> to vector<10x1xf32>
    %40 = vector.broadcast %39 : vector<10x1xf32> to vector<10x256xf32>
    %41 = arith.mulf %38, %40 : vector<10x256xf32>
    %42 = arith.addf %34, %41 : vector<10x256xf32>
    %c16_i32 = arith.constant 16 : i32
    %43 = tpu.dynamic_rotate %30 by %c16_i32 dim 1 : vector<10x256xf32>, i32 -> vector<10x256xf32>
    %44 = vector.extract_strided_slice %33 {offsets = [1, 0], sizes = [1, 256], strides = [1, 1]} : vector<9x256xf32> to vector<1x256xf32>
    %45 = vector.broadcast %44 : vector<1x256xf32> to vector<10x256xf32>
    %46 = arith.mulf %43, %45 : vector<10x256xf32>
    %47 = vector.extract_strided_slice %32 {offsets = [0, 1], sizes = [10, 1], strides = [1, 1]} : vector<10x9xf32> to vector<10x1xf32>
    %48 = vector.broadcast %47 : vector<10x1xf32> to vector<10x256xf32>
    %49 = arith.mulf %46, %48 : vector<10x256xf32>
    %50 = arith.addf %42, %49 : vector<10x256xf32>
    %c15_i32 = arith.constant 15 : i32
    %51 = tpu.dynamic_rotate %30 by %c15_i32 dim 1 : vector<10x256xf32>, i32 -> vector<10x256xf32>
    %52 = vector.extract_strided_slice %33 {offsets = [2, 0], sizes = [1, 256], strides = [1, 1]} : vector<9x256xf32> to vector<1x256xf32>
    %53 = vector.broadcast %52 : vector<1x256xf32> to vector<10x256xf32>
    %54 = arith.mulf %51, %53 : vector<10x256xf32>
    %55 = vector.extract_strided_slice %32 {offsets = [0, 2], sizes = [10, 1], strides = [1, 1]} : vector<10x9xf32> to vector<10x1xf32>
    %56 = vector.broadcast %55 : vector<10x1xf32> to vector<10x256xf32>
    %57 = arith.mulf %54, %56 : vector<10x256xf32>
    %58 = arith.addf %50, %57 : vector<10x256xf32>
    %c1_i32 = arith.constant 1 : i32
    %59 = tpu.dynamic_rotate %30 by %c1_i32 dim 1 : vector<10x256xf32>, i32 -> vector<10x256xf32>
    %60 = vector.extract_strided_slice %33 {offsets = [3, 0], sizes = [1, 256], strides = [1, 1]} : vector<9x256xf32> to vector<1x256xf32>
    %61 = vector.broadcast %60 : vector<1x256xf32> to vector<10x256xf32>
    %62 = arith.mulf %59, %61 : vector<10x256xf32>
    %63 = vector.extract_strided_slice %32 {offsets = [0, 3], sizes = [10, 1], strides = [1, 1]} : vector<10x9xf32> to vector<10x1xf32>
    %64 = vector.broadcast %63 : vector<10x1xf32> to vector<10x256xf32>
    %65 = arith.mulf %62, %64 : vector<10x256xf32>
    %66 = arith.addf %58, %65 : vector<10x256xf32>
    %67 = vector.extract_strided_slice %32 {offsets = [0, 4], sizes = [10, 1], strides = [1, 1]} : vector<10x9xf32> to vector<10x1xf32>
    %68 = vector.broadcast %67 : vector<10x1xf32> to vector<10x256xf32>
    %69 = arith.mulf %30, %68 : vector<10x256xf32>
    %70 = arith.addf %66, %69 : vector<10x256xf32>
    %c255_i32 = arith.constant 255 : i32
    %71 = tpu.dynamic_rotate %30 by %c255_i32 dim 1 : vector<10x256xf32>, i32 -> vector<10x256xf32>
    %72 = vector.extract_strided_slice %33 {offsets = [5, 0], sizes = [1, 256], strides = [1, 1]} : vector<9x256xf32> to vector<1x256xf32>
    %73 = vector.broadcast %72 : vector<1x256xf32> to vector<10x256xf32>
    %74 = arith.mulf %71, %73 : vector<10x256xf32>
    %75 = vector.extract_strided_slice %32 {offsets = [0, 5], sizes = [10, 1], strides = [1, 1]} : vector<10x9xf32> to vector<10x1xf32>
    %76 = vector.broadcast %75 : vector<10x1xf32> to vector<10x256xf32>
    %77 = arith.mulf %74, %76 : vector<10x256xf32>
    %78 = arith.addf %70, %77 : vector<10x256xf32>
    %c241_i32 = arith.constant 241 : i32
    %79 = tpu.dynamic_rotate %30 by %c241_i32 dim 1 : vector<10x256xf32>, i32 -> vector<10x256xf32>
    %80 = vector.extract_strided_slice %33 {offsets = [6, 0], sizes = [1, 256], strides = [1, 1]} : vector<9x256xf32> to vector<1x256xf32>
    %81 = vector.broadcast %80 : vector<1x256xf32> to vector<10x256xf32>
    %82 = arith.mulf %79, %81 : vector<10x256xf32>
    %83 = vector.extract_strided_slice %32 {offsets = [0, 6], sizes = [10, 1], strides = [1, 1]} : vector<10x9xf32> to vector<10x1xf32>
    %84 = vector.broadcast %83 : vector<10x1xf32> to vector<10x256xf32>
    %85 = arith.mulf %82, %84 : vector<10x256xf32>
    %86 = arith.addf %78, %85 : vector<10x256xf32>
    %c240_i32 = arith.constant 240 : i32
    %87 = tpu.dynamic_rotate %30 by %c240_i32 dim 1 : vector<10x256xf32>, i32 -> vector<10x256xf32>
    %88 = vector.extract_strided_slice %33 {offsets = [7, 0], sizes = [1, 256], strides = [1, 1]} : vector<9x256xf32> to vector<1x256xf32>
    %89 = vector.broadcast %88 : vector<1x256xf32> to vector<10x256xf32>
    %90 = arith.mulf %87, %89 : vector<10x256xf32>
    %91 = vector.extract_strided_slice %32 {offsets = [0, 7], sizes = [10, 1], strides = [1, 1]} : vector<10x9xf32> to vector<10x1xf32>
    %92 = vector.broadcast %91 : vector<10x1xf32> to vector<10x256xf32>
    %93 = arith.mulf %90, %92 : vector<10x256xf32>
    %94 = arith.addf %86, %93 : vector<10x256xf32>
    %c239_i32 = arith.constant 239 : i32
    %95 = tpu.dynamic_rotate %30 by %c239_i32 dim 1 : vector<10x256xf32>, i32 -> vector<10x256xf32>
    %96 = vector.extract_strided_slice %33 {offsets = [8, 0], sizes = [1, 256], strides = [1, 1]} : vector<9x256xf32> to vector<1x256xf32>
    %97 = vector.broadcast %96 : vector<1x256xf32> to vector<10x256xf32>
    %98 = arith.mulf %95, %97 : vector<10x256xf32>
    %99 = vector.extract_strided_slice %32 {offsets = [0, 8], sizes = [10, 1], strides = [1, 1]} : vector<10x9xf32> to vector<10x1xf32>
    %100 = vector.broadcast %99 : vector<10x1xf32> to vector<10x256xf32>
    %101 = arith.mulf %98, %100 : vector<10x256xf32>
    %102 = arith.addf %94, %101 : vector<10x256xf32>
    %103 = vector.extract_strided_slice %102 {offsets = [0, 0], sizes = [5, 256], strides = [1, 1]} : vector<10x256xf32> to vector<5x256xf32>
    %cst_11 = arith.constant 5.000000e-01 : f32
    %104 = vector.broadcast %cst_11 : f32 to vector<5x256xf32>
    %105 = arith.mulf %104, %103 : vector<5x256xf32>
    %cst_12 = arith.constant 0.707106769 : f32
    %106 = vector.broadcast %cst_12 : f32 to vector<5x256xf32>
    %107 = arith.mulf %103, %106 : vector<5x256xf32>
    %108 = math.absf %107 : vector<5x256xf32>
    %cst_13 = arith.constant 0.327591091 : f32
    %109 = vector.broadcast %cst_13 : f32 to vector<5x256xf32>
    %110 = arith.mulf %109, %108 : vector<5x256xf32>
    %cst_14 = arith.constant 1.000000e+00 : f32
    %111 = vector.broadcast %cst_14 : f32 to vector<5x256xf32>
    %112 = arith.addf %111, %110 : vector<5x256xf32>
    %cst_15 = arith.constant 1.000000e+00 : f32
    %113 = vector.broadcast %cst_15 : f32 to vector<5x256xf32>
    %114 = arith.divf %113, %112 : vector<5x256xf32>
    %cst_16 = arith.constant 1.06140542 : f32
    %115 = vector.broadcast %cst_16 : f32 to vector<5x256xf32>
    %116 = arith.mulf %115, %114 : vector<5x256xf32>
    %cst_17 = arith.constant -1.45315206 : f32
    %117 = vector.broadcast %cst_17 : f32 to vector<5x256xf32>
    %118 = arith.addf %116, %117 : vector<5x256xf32>
    %119 = arith.mulf %118, %114 : vector<5x256xf32>
    %cst_18 = arith.constant 1.42141378 : f32
    %120 = vector.broadcast %cst_18 : f32 to vector<5x256xf32>
    %121 = arith.addf %119, %120 : vector<5x256xf32>
    %122 = arith.mulf %121, %114 : vector<5x256xf32>
    %cst_19 = arith.constant -0.284496725 : f32
    %123 = vector.broadcast %cst_19 : f32 to vector<5x256xf32>
    %124 = arith.addf %122, %123 : vector<5x256xf32>
    %125 = arith.mulf %124, %114 : vector<5x256xf32>
    %cst_20 = arith.constant 0.254829586 : f32
    %126 = vector.broadcast %cst_20 : f32 to vector<5x256xf32>
    %127 = arith.addf %125, %126 : vector<5x256xf32>
    %128 = arith.mulf %127, %114 : vector<5x256xf32>
    %cst_21 = arith.constant 0.000000e+00 : f32
    %129 = vector.broadcast %cst_21 : f32 to vector<5x256xf32>
    %130 = arith.subf %129, %108 : vector<5x256xf32>
    %131 = arith.mulf %130, %108 : vector<5x256xf32>
    %132 = math.exp %131 : vector<5x256xf32>
    %133 = arith.mulf %128, %132 : vector<5x256xf32>
    %cst_22 = arith.constant 1.000000e+00 : f32
    %134 = vector.broadcast %cst_22 : f32 to vector<5x256xf32>
    %135 = arith.subf %134, %133 : vector<5x256xf32>
    %cst_23 = arith.constant 0.000000e+00 : f32
    %136 = vector.broadcast %cst_23 : f32 to vector<5x256xf32>
    %137 = arith.cmpf oge, %107, %136 : vector<5x256xf32>
    %cst_24 = arith.constant 0.000000e+00 : f32
    %138 = vector.broadcast %cst_24 : f32 to vector<5x256xf32>
    %139 = arith.subf %138, %135 : vector<5x256xf32>
    %140 = arith.select %137, %135, %139 : vector<5x256xi1>, vector<5x256xf32>
    %cst_25 = arith.constant 1.000000e+00 : f32
    %141 = vector.broadcast %cst_25 : f32 to vector<5x256xf32>
    %142 = arith.addf %141, %140 : vector<5x256xf32>
    %143 = arith.mulf %105, %142 : vector<5x256xf32>
    %144 = vector.extract_strided_slice %102 {offsets = [5, 0], sizes = [5, 256], strides = [1, 1]} : vector<10x256xf32> to vector<5x256xf32>
    %145 = arith.mulf %143, %144 : vector<5x256xf32>
    %c0_26 = arith.constant 0 : index
    %c0_27 = arith.constant 0 : index
    %c0_28 = arith.constant 0 : index
    %146 = vector.load %arg8[%c0_26, %c0_27, %c0_28] : memref<1x4x5xf32, #tpu.memory_space<vmem>>, vector<1x4x5xf32>
    %147 = vector.shape_cast %146 : vector<1x4x5xf32> to vector<4x5xf32>
    %cst_29 = arith.constant 0.000000e+00 : f32
    %148 = vector.broadcast %cst_29 : f32 to vector<4x256xf32>
    %149 = vector.extract_strided_slice %147 {offsets = [0, 0], sizes = [4, 1], strides = [1, 1]} : vector<4x5xf32> to vector<4x1xf32>
    %150 = vector.extract_strided_slice %145 {offsets = [0, 0], sizes = [1, 256], strides = [1, 1]} : vector<5x256xf32> to vector<1x256xf32>
    %151 = vector.broadcast %149 : vector<4x1xf32> to vector<4x256xf32>
    %152 = vector.broadcast %150 : vector<1x256xf32> to vector<4x256xf32>
    %153 = arith.mulf %151, %152 : vector<4x256xf32>
    %154 = arith.addf %148, %153 : vector<4x256xf32>
    %155 = vector.extract_strided_slice %147 {offsets = [0, 1], sizes = [4, 1], strides = [1, 1]} : vector<4x5xf32> to vector<4x1xf32>
    %156 = vector.extract_strided_slice %145 {offsets = [1, 0], sizes = [1, 256], strides = [1, 1]} : vector<5x256xf32> to vector<1x256xf32>
    %157 = vector.broadcast %155 : vector<4x1xf32> to vector<4x256xf32>
    %158 = vector.broadcast %156 : vector<1x256xf32> to vector<4x256xf32>
    %159 = arith.mulf %157, %158 : vector<4x256xf32>
    %160 = arith.addf %154, %159 : vector<4x256xf32>
    %161 = vector.extract_strided_slice %147 {offsets = [0, 2], sizes = [4, 1], strides = [1, 1]} : vector<4x5xf32> to vector<4x1xf32>
    %162 = vector.extract_strided_slice %145 {offsets = [2, 0], sizes = [1, 256], strides = [1, 1]} : vector<5x256xf32> to vector<1x256xf32>
    %163 = vector.broadcast %161 : vector<4x1xf32> to vector<4x256xf32>
    %164 = vector.broadcast %162 : vector<1x256xf32> to vector<4x256xf32>
    %165 = arith.mulf %163, %164 : vector<4x256xf32>
    %166 = arith.addf %160, %165 : vector<4x256xf32>
    %167 = vector.extract_strided_slice %147 {offsets = [0, 3], sizes = [4, 1], strides = [1, 1]} : vector<4x5xf32> to vector<4x1xf32>
    %168 = vector.extract_strided_slice %145 {offsets = [3, 0], sizes = [1, 256], strides = [1, 1]} : vector<5x256xf32> to vector<1x256xf32>
    %169 = vector.broadcast %167 : vector<4x1xf32> to vector<4x256xf32>
    %170 = vector.broadcast %168 : vector<1x256xf32> to vector<4x256xf32>
    %171 = arith.mulf %169, %170 : vector<4x256xf32>
    %172 = arith.addf %166, %171 : vector<4x256xf32>
    %173 = vector.extract_strided_slice %147 {offsets = [0, 4], sizes = [4, 1], strides = [1, 1]} : vector<4x5xf32> to vector<4x1xf32>
    %174 = vector.extract_strided_slice %145 {offsets = [4, 0], sizes = [1, 256], strides = [1, 1]} : vector<5x256xf32> to vector<1x256xf32>
    %175 = vector.broadcast %173 : vector<4x1xf32> to vector<4x256xf32>
    %176 = vector.broadcast %174 : vector<1x256xf32> to vector<4x256xf32>
    %177 = arith.mulf %175, %176 : vector<4x256xf32>
    %178 = arith.addf %172, %177 : vector<4x256xf32>
    %c0_30 = arith.constant 0 : index
    %c0_31 = arith.constant 0 : index
    %c0_32 = arith.constant 0 : index
    %179 = vector.load %arg9[%c0_30, %c0_31, %c0_32] : memref<1x4x256xf32, #tpu.memory_space<vmem>>, vector<1x4x256xf32>
    %180 = vector.shape_cast %179 : vector<1x4x256xf32> to vector<4x256xf32>
    %181 = arith.addf %180, %178 : vector<4x256xf32>
    %c0_33 = arith.constant 0 : index
    %c0_34 = arith.constant 0 : index
    %c0_35 = arith.constant 0 : index
    %182 = vector.load %arg9[%c0_33, %c0_34, %c0_35] : memref<1x4x256xf32, #tpu.memory_space<vmem>>, vector<1x4x256xf32>
    %183 = vector.shape_cast %182 : vector<1x4x256xf32> to vector<4x256xf32>
    %184 = vector.shape_cast %181 : vector<4x256xf32> to vector<1x4x256xf32>
    tpu.vector_store %arg9[%c0_33, %c0_34, %c0_35], %184 {strides = array<i32>} : memref<1x4x256xf32, #tpu.memory_space<vmem>>, vector<1x4x256xf32>,
    return
  }
  func.func @transform_0(%arg0: i32, %arg1: i32) -> (i32, i32, i32) {
    %c0_i32 = arith.constant 0 : i32
    %c0_i32_0 = arith.constant 0 : i32
    %c0_i32_1 = arith.constant 0 : i32
    return %arg0, %c0_i32, %c0_i32_0 : i32, i32, i32
  }
  func.func @transform_1(%arg0: i32, %arg1: i32) -> (i32, i32) {
    %c0_i32 = arith.constant 0 : i32
    %c0_i32_0 = arith.constant 0 : i32
    %c0_i32_1 = arith.constant 0 : i32
    return %c0_i32, %c0_i32_0 : i32, i32
  }
  func.func @transform_2(%arg0: i32, %arg1: i32) -> (i32, i32) {
    %c0_i32 = arith.constant 0 : i32
    %c0_i32_0 = arith.constant 0 : i32
    %c0_i32_1 = arith.constant 0 : i32
    return %c0_i32, %c0_i32_0 : i32, i32
  }
  func.func @transform_3(%arg0: i32, %arg1: i32) -> (i32, i32) {
    %c0_i32 = arith.constant 0 : i32
    %c0_i32_0 = arith.constant 0 : i32
    %c0_i32_1 = arith.constant 0 : i32
    return %c0_i32, %c0_i32_0 : i32, i32
  }
  func.func @transform_4(%arg0: i32, %arg1: i32) -> (i32, i32, i32) {
    %c0_i32 = arith.constant 0 : i32
    %c0_i32_0 = arith.constant 0 : i32
    %c0_i32_1 = arith.constant 0 : i32
    return %arg1, %c0_i32, %c0_i32_0 : i32, i32, i32
  }
  func.func @transform_5(%arg0: i32, %arg1: i32) -> (i32, i32, i32) {
    %c0_i32 = arith.constant 0 : i32
    %c0_i32_0 = arith.constant 0 : i32
    %c0_i32_1 = arith.constant 0 : i32
    return %arg1, %c0_i32, %c0_i32_0 : i32, i32, i32
  }
  func.func @transform_6(%arg0: i32, %arg1: i32) -> (i32, i32, i32) {
    %c0_i32 = arith.constant 0 : i32
    %c0_i32_0 = arith.constant 0 : i32
    %c0_i32_1 = arith.constant 0 : i32
    return %arg1, %c0_i32, %c0_i32_0 : i32, i32, i32
  }
  func.func @transform_7(%arg0: i32, %arg1: i32) -> (i32, i32, i32) {
    %c0_i32 = arith.constant 0 : i32
    %c0_i32_0 = arith.constant 0 : i32
    %c0_i32_1 = arith.constant 0 : i32
    return %arg0, %c0_i32, %c0_i32_0 : i32, i32, i32
  }
}

</mosaic_0001>

<llo_original>
// kernel: tpu_custom_call.1
$region0: #{tpu_custom_call.1}
  #allocation0 [shape = 'u32[]', space=smem, size = 0x4, offset = 0x4, fixed_abs, tag = 'smem constant byte address 0x4 - core index']
  #allocation1 [shape = 'u32[72,128]{1,0:T(1,128)}', space=vmem, size = 0x9000, scoped, tag = 'internal scratch']
  #allocation2 [shape = 'f32[4,256]{1,0:T(4,128)}', space=vmem, size = 0x1000, scoped, tag = 'scratch operand']
  %s0 = inlined_call_operand.vmem [shape: f32[2,4,256], index: 0, kind: input, shape index: {}]
  %s1 = inlined_call_operand.vmem [shape: f32[4,1], index: 1, kind: input, shape index: {}]
  %s2 = inlined_call_operand.vmem [shape: f32[4,1], index: 2, kind: input, shape index: {}]
  %s3 = inlined_call_operand.vmem [shape: f32[9,256], index: 3, kind: input, shape index: {}]
  %s4 = inlined_call_operand.vmem [shape: f32[2,10,4], index: 4, kind: input, shape index: {}]
  %s5 = inlined_call_operand.vmem [shape: f32[2,10,9], index: 5, kind: input, shape index: {}]
  %s6 = inlined_call_operand.vmem [shape: f32[2,4,5], index: 6, kind: input, shape index: {}]
  %s7 = inlined_call_operand.hbm [shape: f32[2,4,256], index: 7, kind: output, shape index: {}]
  %s8 = sld [smem:[#allocation0]]
  $region65: #{tpu_custom_call.1} parent=0
    _
  %s10 = ssub.s32 1, %s8
  %s11 = scalar_select 0, %s10, %s8
  $region1: #{tpu_custom_call.1} parent=0
    #allocation3 [shape = 'u8[8192]{0}', space=vmem, size = 0x2000, scoped, tag = 'output window, operand 0']
    #allocation4 [shape = 's32[2]{0}', space=sflag, size = 0x8, scoped, tag = 'scoped memory for tpu_custom_call.1']
    %12 = vsyncpa [#allocation4], 0
    %s13 = scalar_lea.sflag [#allocation4], 1
    %14 = vsyncpa %s13, 0
    loop: start=0, step=1, limit=6
    $region2: #{tpu_custom_call.1} parent=1 // loop_pre_header
      _
    $region3: #{tpu_custom_call.1} parent=1 // loop_header
      %s16 = sphi 0, %s20
      %p17 = scmp.ge.s32.totalorder %s16, 6
      %s23 = sphi 0, %s35
      %s24 = sphi 0, %s31
      %s25 = sphi 0, %s23
      %s26 = sphi 0, %s24
      %s27 = sphi 0, %s25
      %s28 = sphi 0, %s26
      %s38 = sphi 0, %s40
      %s41 = sphi 0, %s38
      %s42 = sphi 0, %s41
      %s58 = sphi 0, %s42
      %s62 = sphi 0, %s62
      %s64 = sphi 0, %s62
      %s65 = sphi 0, %s64
      %s79 = sphi 0, %s65
      %s83 = sphi 0, %s83
      %s85 = sphi 0, %s83
      %s86 = sphi 0, %s85
      %s100 = sphi 0, %s86
      %s104 = sphi 0, %s104
      %s106 = sphi 0, %s104
      %s107 = sphi 0, %s106
      %s121 = sphi 0, %s107
      %s127 = sphi 0, %s129
      %s130 = sphi 0, %s127
      %s131 = sphi 0, %s130
      %s147 = sphi 0, %s131
      %s153 = sphi 0, %s155
      %s156 = sphi 0, %s153
      %s157 = sphi 0, %s156
      %s173 = sphi 0, %s157
      %s179 = sphi 0, %s181
      %s182 = sphi 0, %s179
      %s183 = sphi 0, %s182
      %s199 = sphi 0, %s183
      %s205 = sphi 0, %s207
      %s208 = sphi 0, %s205
      %s209 = sphi 0, %s208
      %s225 = sphi 0, %s209
    $region4: #{tpu_custom_call.1} parent=1 // loop_header_branch
      %19 = sbr.rel (%p17) target = $region8
    $region5: #{tpu_custom_call.1} parent=1 // loop_body
      %s21 = ssub.s32 %s16, 1
      %s22 = ssub.s32 %s16, 2
      %s29 = sadd.s32 1, %s24
      %p30 = scmp.ge.s32.totalorder %s29, 2
      %s31 = scalar_select %p30, 0, %s29
      %s32 = sadd.s32 1, %s23
      %s33 = scalar_select %p30, %s32, %s23
      %p34 = scmp.ge.s32.totalorder %s33, 2
      %s35 = scalar_select %p34, 0, %s33
      %s36 = ssub.s32 %s23, %s35
      %p37 = scmp.eq.s32.totalorder %s36, 0
      %s39 = sadd.s32 %s38, 1
      %s40 = scalar_select %p37, %s38, %s39
      %p43 = pneg %p37
      %p44 = scmp.eq.s32.totalorder %s16, 3
      %p45 = por %p43, %p44
      %p46 = scmp.ne.s32.totalorder %s38, %s41
      %p47 = scmp.eq.s32.totalorder %s16, 0
      %p48 = por %p46, %p47
      %p49 = scmp.ne.s32.totalorder %s38, %s41
      %p50 = scmp.eq.s32.totalorder %s21, 3
      %p51 = por %p49, %p50
      %p52 = scmp.ne.s32.totalorder %s41, %s42
      %p53 = scmp.eq.s32.totalorder %s21, 0
      %p54 = por %p52, %p53
      %p55 = scmp.ne.s32.totalorder %s41, %s42
      %p56 = scmp.eq.s32.totalorder %s22, 3
      %p57 = por %p55, %p56
      %p59 = scmp.ne.s32.totalorder %s42, %s58
      %p60 = scmp.eq.s32.totalorder %s22, 0
      %p61 = por %p59, %p60
      %s63 = sadd.s32 %s62, 1
      %p66 = scmp.eq.s32.totalorder %s16, 3
      %p67 = scmp.ne.s32.totalorder %s62, %s64
      %p68 = scmp.eq.s32.totalorder %s16, 0
      %p69 = por %p67, %p68
      %p70 = scmp.ne.s32.totalorder %s62, %s64
      %p71 = scmp.eq.s32.totalorder %s21, 3
      %p72 = por %p70, %p71
      %p73 = scmp.ne.s32.totalorder %s64, %s65
      %p74 = scmp.eq.s32.totalorder %s21, 0
      %p75 = por %p73, %p74
      %p76 = scmp.ne.s32.totalorder %s64, %s65
      %p77 = scmp.eq.s32.totalorder %s22, 3
      %p78 = por %p76, %p77
      %p80 = scmp.ne.s32.totalorder %s65, %s79
      %p81 = scmp.eq.s32.totalorder %s22, 0
      %p82 = por %p80, %p81
      %s84 = sadd.s32 %s83, 1
      %p87 = scmp.eq.s32.totalorder %s16, 3
      %p88 = scmp.ne.s32.totalorder %s83, %s85
      %p89 = scmp.eq.s32.totalorder %s16, 0
      %p90 = por %p88, %p89
      %p91 = scmp.ne.s32.totalorder %s83, %s85
      %p92 = scmp.eq.s32.totalorder %s21, 3
      %p93 = por %p91, %p92
      %p94 = scmp.ne.s32.totalorder %s85, %s86
      %p95 = scmp.eq.s32.totalorder %s21, 0
      %p96 = por %p94, %p95
      %p97 = scmp.ne.s32.totalorder %s85, %s86
      %p98 = scmp.eq.s32.totalorder %s22, 3
      %p99 = por %p97, %p98
      %p101 = scmp.ne.s32.totalorder %s86, %s100
      %p102 = scmp.eq.s32.totalorder %s22, 0
      %p103 = por %p101, %p102
      %s105 = sadd.s32 %s104, 1
      %p108 = scmp.eq.s32.totalorder %s16, 3
      %p109 = scmp.ne.s32.totalorder %s104, %s106
      %p110 = scmp.eq.s32.totalorder %s16, 0
      %p111 = por %p109, %p110
      %p112 = scmp.ne.s32.totalorder %s104, %s106
      %p113 = scmp.eq.s32.totalorder %s21, 3
      %p114 = por %p112, %p113
      %p115 = scmp.ne.s32.totalorder %s106, %s107
      %p116 = scmp.eq.s32.totalorder %s21, 0
      %p117 = por %p115, %p116
      %p118 = scmp.ne.s32.totalorder %s106, %s107
      %p119 = scmp.eq.s32.totalorder %s22, 3
      %p120 = por %p118, %p119
      %p122 = scmp.ne.s32.totalorder %s107, %s121
      %p123 = scmp.eq.s32.totalorder %s22, 0
      %p124 = por %p122, %p123
      %s125 = ssub.s32 %s24, %s31
      %p126 = scmp.eq.s32.totalorder %s125, 0
      %s128 = sadd.s32 %s127, 1
      %s129 = scalar_select %p126, %s127, %s128
      %p132 = pneg %p126
      %p133 = scmp.eq.s32.totalorder %s16, 3
      %p134 = por %p132, %p133
      %p135 = scmp.ne.s32.totalorder %s127, %s130
      %p136 = scmp.eq.s32.totalorder %s16, 0
      %p137 = por %p135, %p136
      %p138 = scmp.ne.s32.totalorder %s127, %s130
      %p139 = scmp.eq.s32.totalorder %s21, 3
      %p140 = por %p138, %p139
      %p141 = scmp.ne.s32.totalorder %s130, %s131
      %p142 = scmp.eq.s32.totalorder %s21, 0
      %p143 = por %p141, %p142
      %p144 = scmp.ne.s32.totalorder %s130, %s131
      %p145 = scmp.eq.s32.totalorder %s22, 3
      %p146 = por %p144, %p145
      %p148 = scmp.ne.s32.totalorder %s131, %s147
      %p149 = scmp.eq.s32.totalorder %s22, 0
      %p150 = por %p148, %p149
      %s151 = ssub.s32 %s24, %s31
      %p152 = scmp.eq.s32.totalorder %s151, 0
      %s154 = sadd.s32 %s153, 1
      %s155 = scalar_select %p152, %s153, %s154
      %p158 = pneg %p152
      %p159 = scmp.eq.s32.totalorder %s16, 3
      %p160 = por %p158, %p159
      %p161 = scmp.ne.s32.totalorder %s153, %s156
      %p162 = scmp.eq.s32.totalorder %s16, 0
      %p163 = por %p161, %p162
      %p164 = scmp.ne.s32.totalorder %s153, %s156
      %p165 = scmp.eq.s32.totalorder %s21, 3
      %p166 = por %p164, %p165
      %p167 = scmp.ne.s32.totalorder %s156, %s157
      %p168 = scmp.eq.s32.totalorder %s21, 0
      %p169 = por %p167, %p168
      %p170 = scmp.ne.s32.totalorder %s156, %s157
      %p171 = scmp.eq.s32.totalorder %s22, 3
      %p172 = por %p170, %p171
      %p174 = scmp.ne.s32.totalorder %s157, %s173
      %p175 = scmp.eq.s32.totalorder %s22, 0
      %p176 = por %p174, %p175
      %s177 = ssub.s32 %s24, %s31
      %p178 = scmp.eq.s32.totalorder %s177, 0
      %s180 = sadd.s32 %s179, 1
      %s181 = scalar_select %p178, %s179, %s180
      %p184 = pneg %p178
      %p185 = scmp.eq.s32.totalorder %s16, 3
      %p186 = por %p184, %p185
      %p187 = scmp.ne.s32.totalorder %s179, %s182
      %p188 = scmp.eq.s32.totalorder %s16, 0
      %p189 = por %p187, %p188
      %p190 = scmp.ne.s32.totalorder %s179, %s182
      %p191 = scmp.eq.s32.totalorder %s21, 3
      %p192 = por %p190, %p191
      %p193 = scmp.ne.s32.totalorder %s182, %s183
      %p194 = scmp.eq.s32.totalorder %s21, 0
      %p195 = por %p193, %p194
      %p196 = scmp.ne.s32.totalorder %s182, %s183
      %p197 = scmp.eq.s32.totalorder %s22, 3
      %p198 = por %p196, %p197
      %p200 = scmp.ne.s32.totalorder %s183, %s199
      %p201 = scmp.eq.s32.totalorder %s22, 0
      %p202 = por %p200, %p201
      %s203 = ssub.s32 %s23, %s35
      %p204 = scmp.eq.s32.totalorder %s203, 0
      %s206 = sadd.s32 %s205, 1
      %s207 = scalar_select %p204, %s205, %s206
      %p210 = pneg %p204
      %p211 = scmp.eq.s32.totalorder %s16, 3
      %p212 = por %p210, %p211
      %p213 = scmp.ne.s32.totalorder %s205, %s208
      %p214 = scmp.eq.s32.totalorder %s16, 0
      %p215 = por %p213, %p214
      %p216 = scmp.ne.s32.totalorder %s205, %s208
      %p217 = scmp.eq.s32.totalorder %s21, 3
      %p218 = por %p216, %p217
      %p219 = scmp.ne.s32.totalorder %s208, %s209
      %p220 = scmp.eq.s32.totalorder %s21, 0
      %p221 = por %p219, %p220
      %p222 = scmp.ne.s32.totalorder %s208, %s209
      %p223 = scmp.eq.s32.totalorder %s22, 3
      %p224 = por %p222, %p223
      %p226 = scmp.ne.s32.totalorder %s209, %s225
      %p227 = scmp.eq.s32.totalorder %s22, 0
      %p228 = por %p226, %p227
      %p229 = scmp.le.s32.totalorder 1, %s16
      %p230 = scmp.lt.s32.totalorder %s16, 5
      %p231 = pnand %p229, %p230
      %p232 = pneg %p231
      // Predicated region
      $region9: #{tpu_custom_call.1} parent=5 // pred_check
        _
      $region10: #{tpu_custom_call.1} parent=5 // pred_check_branch
        %234 = sbr.rel (%p231) target = $region12
      $region11: #{tpu_custom_call.1} parent=5 // pred_region
        %s235 = ssub.s32 %s16, 1
        // Predicated region
        $region13: #{tpu_custom_call.1} parent=11 // pred_check
          %p236 = pneg %p75
        $region14: #{tpu_custom_call.1} parent=11 // pred_check_branch
          %238 = sbr.rel (%p236) target = $region16
        $region15: #{tpu_custom_call.1} parent=11 // pred_region
          _
        $region16: #{tpu_custom_call.1} parent=11 // pred_fallthru
          _
        // Predicated region
        $region17: #{tpu_custom_call.1} parent=11 // pred_check
          %p239 = pneg %p96
        $region18: #{tpu_custom_call.1} parent=11 // pred_check_branch
          %241 = sbr.rel (%p239) target = $region20
        $region19: #{tpu_custom_call.1} parent=11 // pred_region
          _
        $region20: #{tpu_custom_call.1} parent=11 // pred_fallthru
          _
        // Predicated region
        $region21: #{tpu_custom_call.1} parent=11 // pred_check
          %p242 = pneg %p117
        $region22: #{tpu_custom_call.1} parent=11 // pred_check_branch
          %244 = sbr.rel (%p242) target = $region24
        $region23: #{tpu_custom_call.1} parent=11 // pred_region
          _
        $region24: #{tpu_custom_call.1} parent=11 // pred_fallthru
          _
      $region12: #{tpu_custom_call.1} parent=5 // pred_fallthru
        _
      %p245 = scmp.lt.s32.totalorder %s16, 4
      // Predicated region
      $region25: #{tpu_custom_call.1} parent=5 // pred_check
        %p246 = pneg %p245
      $region26: #{tpu_custom_call.1} parent=5 // pred_check_branch
        %248 = sbr.rel (%p246) target = $region28
      $region27: #{tpu_custom_call.1} parent=5 // pred_region
        // Predicated region
        $region29: #{tpu_custom_call.1} parent=27 // pred_check
          %p249 = pneg %p48
        $region30: #{tpu_custom_call.1} parent=27 // pred_check_branch
          %251 = sbr.rel (%p249) target = $region32
        $region31: #{tpu_custom_call.1} parent=27 // pred_region
          %p252 = scmp.lt.s32.totalorder %s23, 1
          %s253 = scalar_select %p252, %s23, 1
          %s254 = smul.addr %s253, 2
          %s255 = smul.addr %s254, 4
          %s256 = scalar_lea.vmem %s0, %s255
        $region32: #{tpu_custom_call.1} parent=27 // pred_fallthru
          _
        // Predicated region
        $region33: #{tpu_custom_call.1} parent=27 // pred_check
          %p257 = pneg %p137
        $region34: #{tpu_custom_call.1} parent=27 // pred_check_branch
          %259 = sbr.rel (%p257) target = $region36
        $region35: #{tpu_custom_call.1} parent=27 // pred_region
          %p260 = scmp.lt.s32.totalorder %s24, 1
          %s261 = scalar_select %p260, %s24, 1
          %s262 = smul.addr %s261, 2
          %s263 = smul.addr %s262, 8
          %s264 = scalar_lea.vmem %s4, %s263
        $region36: #{tpu_custom_call.1} parent=27 // pred_fallthru
          _
        // Predicated region
        $region37: #{tpu_custom_call.1} parent=27 // pred_check
          %p265 = pneg %p163
        $region38: #{tpu_custom_call.1} parent=27 // pred_check_branch
          %267 = sbr.rel (%p265) target = $region40
        $region39: #{tpu_custom_call.1} parent=27 // pred_region
          %p268 = scmp.lt.s32.totalorder %s24, 1
          %s269 = scalar_select %p268, %s24, 1
          %s270 = smul.addr %s269, 2
          %s271 = smul.addr %s270, 8
          %s272 = scalar_lea.vmem %s5, %s271
        $region40: #{tpu_custom_call.1} parent=27 // pred_fallthru
          _
        // Predicated region
        $region41: #{tpu_custom_call.1} parent=27 // pred_check
          %p273 = pneg %p189
        $region42: #{tpu_custom_call.1} parent=27 // pred_check_branch
          %275 = sbr.rel (%p273) target = $region44
        $region43: #{tpu_custom_call.1} parent=27 // pred_region
          %p276 = scmp.lt.s32.totalorder %s24, 1
          %s277 = scalar_select %p276, %s24, 1
          %s278 = smul.addr %s277, 4
          %s279 = scalar_lea.vmem %s6, %s278
        $region44: #{tpu_custom_call.1} parent=27 // pred_fallthru
          _
      $region28: #{tpu_custom_call.1} parent=5 // pred_fallthru
        _
      %p280 = scmp.le.s32.totalorder 1, %s16
      %p281 = scmp.lt.s32.totalorder %s16, 5
      %p282 = pnand %p280, %p281
      %p283 = pneg %p282
      // Predicated region
      $region45: #{tpu_custom_call.1} parent=5 // pred_check
        _
      $region46: #{tpu_custom_call.1} parent=5 // pred_check_branch
        %285 = sbr.rel (%p282) target = $region48
      $region47: #{tpu_custom_call.1} parent=5 // pred_region
        %s286 = ssub.s32 %s16, 1
        %p287 = scmp.lt.s32.totalorder %s25, 1
        %s288 = scalar_select %p287, %s25, 1
        %s289 = smul.addr %s288, 2
        %s290 = smul.addr %s289, 4
        %s291 = scalar_lea.vmem %s0, %s290
        %p292 = pneg %p54
        %p293 = pneg %p51
        %p294 = pneg %p75
        %p295 = pneg %p72
        %p296 = pneg %p96
        %p297 = pneg %p93
        %p298 = pneg %p117
        %p299 = pneg %p114
        %p300 = scmp.lt.s32.totalorder %s26, 1
        %s301 = scalar_select %p300, %s26, 1
        %s302 = smul.addr %s301, 2
        %s303 = smul.addr %s302, 8
        %s304 = scalar_lea.vmem %s4, %s303
        %p305 = pneg %p143
        %p306 = pneg %p140
        %p307 = scmp.lt.s32.totalorder %s26, 1
        %s308 = scalar_select %p307, %s26, 1
        %s309 = smul.addr %s308, 2
        %s310 = smul.addr %s309, 8
        %s311 = scalar_lea.vmem %s5, %s310
        %p312 = pneg %p169
        %p313 = pneg %p166
        %p314 = scmp.lt.s32.totalorder %s26, 1
        %s315 = scalar_select %p314, %s26, 1
        %s316 = smul.addr %s315, 4
        %s317 = scalar_lea.vmem %s6, %s316
        %p318 = pneg %p195
        %p319 = pneg %p192
        %p320 = pneg %p221
        %p321 = pneg %p218
        %s322 = sand.u32 %s208, 1
        %s323 = scalar_lea.sflag [#allocation4], %s322
        %s324 = sand.u32 %s208, 1
        %s325 = smul.addr %s324, 8
        %s326 = scalar_lea.vmem [#allocation3], %s325
        %p327 = scmp.lt.s32.totalorder %s25, 1
        %s328 = scalar_select %p327, %s25, 1
        %s329 = smul.addr %s328, 2
        %s330 = smul.addr %s329, 4
        %s331 = scalar_lea.vmem %s0, %s330
        %p332 = scmp.lt.s32.totalorder %s26, 1
        %s333 = scalar_select %p332, %s26, 1
        %s334 = smul.addr %s333, 2
        %s335 = smul.addr %s334, 8
        %s336 = scalar_lea.vmem %s4, %s335
        %p337 = scmp.lt.s32.totalorder %s26, 1
        %s338 = scalar_select %p337, %s26, 1
        %s339 = smul.addr %s338, 2
        %s340 = smul.addr %s339, 8
        %s341 = scalar_lea.vmem %s5, %s340
        %p342 = scmp.lt.s32.totalorder %s26, 1
        %s343 = scalar_select %p342, %s26, 1
        %s344 = smul.addr %s343, 4
        %s345 = scalar_lea.vmem %s6, %s344
        %p346 = scmp.eq.s32.totalorder %s26, 0
        // Predicated region
        $region49: #{tpu_custom_call.1} parent=47 // pred_check
          %p347 = pneg %p346
        $region50: #{tpu_custom_call.1} parent=47 // pred_check_branch
          %349 = sbr.rel (%p347) target = $region52
        $region51: #{tpu_custom_call.1} parent=47 // pred_region
          %v350 = vld [vmem:[%s331] sm:$0xff]
          %352 = vst [vmem:[#allocation1] ss:$2 sm:$0xff] %v350
          %v353 = vld.sshfl [vmem:[#allocation1] sm:$0xff pattern:$0x75316420]
          %v354 = vld.sshfl [vmem:[#allocation1 + $0x8] sm:$0xff pattern:$0x75316420]
          %vm357 = vcmask 1043456
          %v358 = vsel %vm357, %v353, 0.0
          %v359 = vrot.slane %v358, 4
          %v360 = vadd.f32 %v358, %v359
          %v361 = vrot.slane %v360, 2
          %v362 = vadd.f32 %v360, %v361
          %v363 = vrot.slane %v362, 1
          %v364 = vadd.f32 %v362, %v363
          %v365 = vsel %vm357, %v354, 0.0
          %v366 = vrot.slane %v365, 4
          %v367 = vadd.f32 %v365, %v366
          %v368 = vrot.slane %v367, 2
          %v369 = vadd.f32 %v367, %v368
          %v370 = vrot.slane %v369, 1
          %v371 = vadd.f32 %v369, %v370
          %v372 = vrcp.pop 4.0
          %v373 = vmul.f32 4.0, %v372
          %v374 = vsub.f32 1.0, %v373
          %v375 = vmul.f32 %v372, %v374
          %v376 = vadd.f32 %v372, %v375
          %vm377 = vweird.f32 %v372
          %v378 = vsel %vm377, %v372, %v376
          %v379 = vmul.f32 %v364, %v378
          %v380 = vmul.f32 %v371, %v378
          %v383 = vrot.slane %v380, 4
          %v384 = vsel %vm357, %v379, %v383
          %v386 = vsub.f32 %v350, %v384
          %v387 = vmul.f32 %v386, %v386
          %389 = vst [vmem:[#allocation1] ss:$2 sm:$0xff] %v387
          %v390 = vld.sshfl [vmem:[#allocation1] sm:$0xff pattern:$0x75316420]
          %v391 = vld.sshfl [vmem:[#allocation1 + $0x8] sm:$0xff pattern:$0x75316420]
          %v394 = vsel %vm357, %v390, 0.0
          %v395 = vrot.slane %v394, 4
          %v396 = vadd.f32 %v394, %v395
          %v397 = vrot.slane %v396, 2
          %v398 = vadd.f32 %v396, %v397
          %v399 = vrot.slane %v398, 1
          %v400 = vadd.f32 %v398, %v399
          %v401 = vsel %vm357, %v391, 0.0
          %v402 = vrot.slane %v401, 4
          %v403 = vadd.f32 %v401, %v402
          %v404 = vrot.slane %v403, 2
          %v405 = vadd.f32 %v403, %v404
          %v406 = vrot.slane %v405, 1
          %v407 = vadd.f32 %v405, %v406
          %v408 = vmul.f32 %v400, %v378
          %v409 = vmul.f32 %v407, %v378
          %v410 = vld [vmem:[%s1] sm:$0xf]
          %v411 = vadd.f32 %v408, 1e-06
          %v412 = vadd.f32 %v409, 1e-06
          %v413 = vrsqrt.pop %v411
          %v414 = vmul.f32 %v413, %v411
          %v415 = vmul.f32 %v414, %v413
          %v416 = vmul.f32 0.5, %v415
          %v417 = vsub.f32 1.5, %v416
          %v418 = vmul.f32 %v413, %v417
          %vm419 = vweird.f32 %v411
          %vm420 = vweird.f32 %v413
          %vm421 = vmor %vm419, %vm420
          %v422 = vsel %vm421, %v413, %v418
          %v423 = vrsqrt.pop %v412
          %v424 = vmul.f32 %v423, %v412
          %v425 = vmul.f32 %v424, %v423
          %v426 = vmul.f32 0.5, %v425
          %v427 = vsub.f32 1.5, %v426
          %v428 = vmul.f32 %v423, %v427
          %vm429 = vweird.f32 %v412
          %vm430 = vweird.f32 %v423
          %vm431 = vmor %vm429, %vm430
          %v432 = vsel %vm431, %v423, %v428
          %v435 = vrot.slane %v432, 4
          %v436 = vsel %vm357, %v422, %v435
          %v438 = vmul.f32 %v386, %v436
          %440 = vset.pattern.permute.xlu0 0
          %441 = vperm.xlu0 %440, %v410
          %v442 = vpop.permute.xlu0 %441
          %445 = vst [vmem:[#allocation1] ss:$2 sm:$0xff] %v438
          %v446 = vld.sshfl [vmem:[#allocation1] sm:$0xff pattern:$0x75316420]
          %v447 = vld.sshfl [vmem:[#allocation1 + $0x8] sm:$0xff pattern:$0x75316420]
          %v450 = vmul.f32 %v442, %v446
          %v451 = vmul.f32 %v442, %v447
          %v452 = vld [vmem:[%s2] sm:$0xf]
          %454 = vset.pattern.permute.xlu0 0
          %455 = vperm.xlu0 %454, %v452
          %v456 = vpop.permute.xlu0 %455
          %v458 = vadd.f32 %v450, %v456
          %v459 = vadd.f32 %v451, %v456
          %v462 = vrot.slane %v459, 4
          %v463 = vsel %vm357, %v458, %v462
          %465 = vst [vmem:[#allocation2] sm:$0xff] %v463
          %466 = vst [vmem:[%s326] sm:$0xff] 0.0
        $region52: #{tpu_custom_call.1} parent=47 // pred_fallthru
          _
        %v467 = vld [vmem:[#allocation2] sm:$0xff]
        %v468 = vld [vmem:[%s336] sm:$0xff]
        %v469 = vld [vmem:[%s336 + $0x8] sm:$0x3]
        %471 = vset.pattern.permute.xlu0 0
        %472 = vperm.xlu0 %471, %v468
        %v473 = vpop.permute.xlu0 %472
        %476 = vset.pattern.permute.xlu0 0
        %477 = vperm.xlu0 %476, %v469
        %v478 = vpop.permute.xlu0 %477
        %v481 = vperm.slane %v467, 0
        %v482 = vperm.slane %v467, 4
        %v485 = vperm.slane %v481, 0
        %v486 = vperm.slane %v482, 0
        %v487 = vmul.f32 %v473, %v485
        %v488 = vmul.f32 %v473, %v486
        %v489 = vmul.f32 %v478, %v485
        %v490 = vmul.f32 %v478, %v486
        %v491 = vadd.f32 %v487, 0.0
        %v492 = vadd.f32 %v488, 0.0
        %v493 = vadd.f32 %v489, 0.0
        %v494 = vadd.f32 %v490, 0.0
        %495 = vset.pattern.permute.xlu0 1
        %496 = vperm.xlu0 %495, %v468
        %v497 = vpop.permute.xlu0 %496
        %499 = vset.pattern.permute.xlu0 1
        %500 = vperm.xlu0 %499, %v469
        %v501 = vpop.permute.xlu0 %500
        %v503 = vperm.slane %v467, 1
        %v504 = vperm.slane %v467, 5
        %v507 = vperm.slane %v503, 1
        %v508 = vperm.slane %v504, 1
        %v509 = vmul.f32 %v497, %v507
        %v510 = vmul.f32 %v497, %v508
        %v511 = vmul.f32 %v501, %v507
        %v512 = vmul.f32 %v501, %v508
        %v513 = vadd.f32 %v491, %v509
        %v514 = vadd.f32 %v492, %v510
        %v515 = vadd.f32 %v493, %v511
        %v516 = vadd.f32 %v494, %v512
        %517 = vset.pattern.permute.xlu0 2
        %518 = vperm.xlu0 %517, %v468
        %v519 = vpop.permute.xlu0 %518
        %521 = vset.pattern.permute.xlu0 2
        %522 = vperm.xlu0 %521, %v469
        %v523 = vpop.permute.xlu0 %522
        %v525 = vperm.slane %v467, 2
        %v526 = vperm.slane %v467, 6
        %v529 = vperm.slane %v525, 2
        %v530 = vperm.slane %v526, 2
        %v531 = vmul.f32 %v519, %v529
        %v532 = vmul.f32 %v519, %v530
        %v533 = vmul.f32 %v523, %v529
        %v534 = vmul.f32 %v523, %v530
        %v535 = vadd.f32 %v513, %v531
        %v536 = vadd.f32 %v514, %v532
        %v537 = vadd.f32 %v515, %v533
        %v538 = vadd.f32 %v516, %v534
        %539 = vset.pattern.permute.xlu0 3
        %540 = vperm.xlu0 %539, %v468
        %v541 = vpop.permute.xlu0 %540
        %543 = vset.pattern.permute.xlu0 3
        %544 = vperm.xlu0 %543, %v469
        %v545 = vpop.permute.xlu0 %544
        %v547 = vperm.slane %v467, 3
        %v548 = vperm.slane %v467, 7
        %v551 = vperm.slane %v547, 3
        %v552 = vperm.slane %v548, 3
        %v553 = vmul.f32 %v541, %v551
        %v554 = vmul.f32 %v541, %v552
        %v555 = vmul.f32 %v545, %v551
        %v556 = vmul.f32 %v545, %v552
        %v557 = vadd.f32 %v535, %v553
        %v558 = vadd.f32 %v536, %v554
        %v559 = vadd.f32 %v537, %v555
        %v560 = vadd.f32 %v538, %v556
        %v561 = vld [vmem:[%s341] sm:$0xff]
        %v562 = vld [vmem:[%s341 + $0x8] sm:$0x3]
        %v563 = vld [vmem:[%s3] sm:$0xff]
        %v564 = vld [vmem:[%s3 + $0x8] sm:$0xff]
        %v565 = vld [vmem:[%s3 + $0x10] sm:$0x1]
        %v566 = vld [vmem:[%s3 + $0x18] sm:$0x1]
        %567 = vrot.lane.b32.xlu0 %v557, 17
        %v568 = vpop.permute.xlu0 %567
        %569 = vrot.lane.b32.xlu0 %v559, 17
        %v570 = vpop.permute.xlu0 %569
        %571 = vrot.lane.b32.xlu0 %v558, 17
        %v572 = vpop.permute.xlu0 %571
        %573 = vrot.lane.b32.xlu0 %v560, 17
        %v574 = vpop.permute.xlu0 %573
        %v575 = vlaneseq
        %v576 = vand.u32 %v575, 127
        %vm577 = vcmp.lt.s32.totalorder %v576, 17
        %v578 = vsel %vm577, %v568, %v572
        %v579 = vsel %vm577, %v570, %v574
        %v580 = vsel %vm577, %v572, %v568
        %v581 = vsel %vm577, %v574, %v570
        %v582 = vperm.slane %v563, 0
        %v583 = vperm.slane %v564, 0
        %v584 = vmul.f32 %v580, %v582
        %v585 = vmul.f32 %v578, %v583
        %v586 = vmul.f32 %v581, %v582
        %v587 = vmul.f32 %v579, %v583
        %589 = vset.pattern.permute.xlu0 0
        %590 = vperm.xlu0 %589, %v561
        %v591 = vpop.permute.xlu0 %590
        %594 = vset.pattern.permute.xlu0 0
        %595 = vperm.xlu0 %594, %v562
        %v596 = vpop.permute.xlu0 %595
        %v598 = vmul.f32 %v584, %v591
        %v599 = vmul.f32 %v585, %v591
        %v600 = vmul.f32 %v586, %v596
        %v601 = vmul.f32 %v587, %v596
        %v602 = vadd.f32 %v598, 0.0
        %v603 = vadd.f32 %v599, 0.0
        %v604 = vadd.f32 %v600, 0.0
        %v605 = vadd.f32 %v601, 0.0
        %606 = vrot.lane.b32.xlu0 %v557, 16
        %v607 = vpop.permute.xlu0 %606
        %608 = vrot.lane.b32.xlu0 %v559, 16
        %v609 = vpop.permute.xlu0 %608
        %610 = vrot.lane.b32.xlu0 %v558, 16
        %v611 = vpop.permute.xlu0 %610
        %612 = vrot.lane.b32.xlu0 %v560, 16
        %v613 = vpop.permute.xlu0 %612
        %vm614 = vcmp.lt.s32.totalorder %v576, 16
        %v615 = vsel %vm614, %v607, %v611
        %v616 = vsel %vm614, %v609, %v613
        %v617 = vsel %vm614, %v611, %v607
        %v618 = vsel %vm614, %v613, %v609
        %v619 = vperm.slane %v563, 1
        %v620 = vperm.slane %v564, 1
        %v621 = vmul.f32 %v617, %v619
        %v622 = vmul.f32 %v615, %v620
        %v623 = vmul.f32 %v618, %v619
        %v624 = vmul.f32 %v616, %v620
        %625 = vset.pattern.permute.xlu0 1
        %626 = vperm.xlu0 %625, %v561
        %v627 = vpop.permute.xlu0 %626
        %629 = vset.pattern.permute.xlu0 1
        %630 = vperm.xlu0 %629, %v562
        %v631 = vpop.permute.xlu0 %630
        %v633 = vmul.f32 %v621, %v627
        %v634 = vmul.f32 %v622, %v627
        %v635 = vmul.f32 %v623, %v631
        %v636 = vmul.f32 %v624, %v631
        %v637 = vadd.f32 %v602, %v633
        %v638 = vadd.f32 %v603, %v634
        %v639 = vadd.f32 %v604, %v635
        %v640 = vadd.f32 %v605, %v636
        %641 = vrot.lane.b32.xlu0 %v557, 15
        %v642 = vpop.permute.xlu0 %641
        %643 = vrot.lane.b32.xlu0 %v559, 15
        %v644 = vpop.permute.xlu0 %643
        %645 = vrot.lane.b32.xlu0 %v558, 15
        %v646 = vpop.permute.xlu0 %645
        %647 = vrot.lane.b32.xlu0 %v560, 15
        %v648 = vpop.permute.xlu0 %647
        %vm649 = vcmp.lt.s32.totalorder %v576, 15
        %v650 = vsel %vm649, %v642, %v646
        %v651 = vsel %vm649, %v644, %v648
        %v652 = vsel %vm649, %v646, %v642
        %v653 = vsel %vm649, %v648, %v644
        %v654 = vperm.slane %v563, 2
        %v655 = vperm.slane %v564, 2
        %v656 = vmul.f32 %v652, %v654
        %v657 = vmul.f32 %v650, %v655
        %v658 = vmul.f32 %v653, %v654
        %v659 = vmul.f32 %v651, %v655
        %660 = vset.pattern.permute.xlu0 2
        %661 = vperm.xlu0 %660, %v561
        %v662 = vpop.permute.xlu0 %661
        %664 = vset.pattern.permute.xlu0 2
        %665 = vperm.xlu0 %664, %v562
        %v666 = vpop.permute.xlu0 %665
        %v668 = vmul.f32 %v656, %v662
        %v669 = vmul.f32 %v657, %v662
        %v670 = vmul.f32 %v658, %v666
        %v671 = vmul.f32 %v659, %v666
        %v672 = vadd.f32 %v637, %v668
        %v673 = vadd.f32 %v638, %v669
        %v674 = vadd.f32 %v639, %v670
        %v675 = vadd.f32 %v640, %v671
        %676 = vrot.lane.b32.xlu0 %v557, 1
        %v677 = vpop.permute.xlu0 %676
        %678 = vrot.lane.b32.xlu0 %v559, 1
        %v679 = vpop.permute.xlu0 %678
        %680 = vrot.lane.b32.xlu0 %v558, 1
        %v681 = vpop.permute.xlu0 %680
        %682 = vrot.lane.b32.xlu0 %v560, 1
        %v683 = vpop.permute.xlu0 %682
        %vm684 = vcmp.lt.s32.totalorder %v576, 1
        %v685 = vsel %vm684, %v677, %v681
        %v686 = vsel %vm684, %v679, %v683
        %v687 = vsel %vm684, %v681, %v677
        %v688 = vsel %vm684, %v683, %v679
        %v689 = vperm.slane %v563, 3
        %v690 = vperm.slane %v564, 3
        %v691 = vmul.f32 %v687, %v689
        %v692 = vmul.f32 %v685, %v690
        %v693 = vmul.f32 %v688, %v689
        %v694 = vmul.f32 %v686, %v690
        %695 = vset.pattern.permute.xlu0 3
        %696 = vperm.xlu0 %695, %v561
        %v697 = vpop.permute.xlu0 %696
        %699 = vset.pattern.permute.xlu0 3
        %700 = vperm.xlu0 %699, %v562
        %v701 = vpop.permute.xlu0 %700
        %v703 = vmul.f32 %v691, %v697
        %v704 = vmul.f32 %v692, %v697
        %v705 = vmul.f32 %v693, %v701
        %v706 = vmul.f32 %v694, %v701
        %v707 = vadd.f32 %v672, %v703
        %v708 = vadd.f32 %v673, %v704
        %v709 = vadd.f32 %v674, %v705
        %v710 = vadd.f32 %v675, %v706
        %711 = vset.pattern.permute.xlu0 4
        %712 = vperm.xlu0 %711, %v561
        %v713 = vpop.permute.xlu0 %712
        %715 = vset.pattern.permute.xlu0 4
        %716 = vperm.xlu0 %715, %v562
        %v717 = vpop.permute.xlu0 %716
        %v719 = vmul.f32 %v557, %v713
        %v720 = vmul.f32 %v558, %v713
        %v721 = vmul.f32 %v559, %v717
        %v722 = vmul.f32 %v560, %v717
        %v723 = vadd.f32 %v707, %v719
        %v724 = vadd.f32 %v708, %v720
        %v725 = vadd.f32 %v709, %v721
        %v726 = vadd.f32 %v710, %v722
        %727 = vrot.lane.b32.xlu0 %v557, 127
        %v728 = vpop.permute.xlu0 %727
        %729 = vrot.lane.b32.xlu0 %v559, 127
        %v730 = vpop.permute.xlu0 %729
        %731 = vrot.lane.b32.xlu0 %v558, 127
        %v732 = vpop.permute.xlu0 %731
        %733 = vrot.lane.b32.xlu0 %v560, 127
        %v734 = vpop.permute.xlu0 %733
        %vm735 = vcmp.lt.s32.totalorder %v576, 127
        %v736 = vsel %vm735, %v728, %v732
        %v737 = vsel %vm735, %v730, %v734
        %v738 = vsel %vm735, %v732, %v728
        %v739 = vsel %vm735, %v734, %v730
        %v740 = vperm.slane %v563, 5
        %v741 = vperm.slane %v564, 5
        %v742 = vmul.f32 %v736, %v740
        %v743 = vmul.f32 %v738, %v741
        %v744 = vmul.f32 %v737, %v740
        %v745 = vmul.f32 %v739, %v741
        %746 = vset.pattern.permute.xlu0 5
        %747 = vperm.xlu0 %746, %v561
        %v748 = vpop.permute.xlu0 %747
        %750 = vset.pattern.permute.xlu0 5
        %751 = vperm.xlu0 %750, %v562
        %v752 = vpop.permute.xlu0 %751
        %v754 = vmul.f32 %v742, %v748
        %v755 = vmul.f32 %v743, %v748
        %v756 = vmul.f32 %v744, %v752
        %v757 = vmul.f32 %v745, %v752
        %v758 = vadd.f32 %v723, %v754
        %v759 = vadd.f32 %v724, %v755
        %v760 = vadd.f32 %v725, %v756
        %v761 = vadd.f32 %v726, %v757
        %762 = vrot.lane.b32.xlu0 %v557, 113
        %v763 = vpop.permute.xlu0 %762
        %764 = vrot.lane.b32.xlu0 %v559, 113
        %v765 = vpop.permute.xlu0 %764
        %766 = vrot.lane.b32.xlu0 %v558, 113
        %v767 = vpop.permute.xlu0 %766
        %768 = vrot.lane.b32.xlu0 %v560, 113
        %v769 = vpop.permute.xlu0 %768
        %vm770 = vcmp.lt.s32.totalorder %v576, 113
        %v771 = vsel %vm770, %v763, %v767
        %v772 = vsel %vm770, %v765, %v769
        %v773 = vsel %vm770, %v767, %v763
        %v774 = vsel %vm770, %v769, %v765
        %v775 = vperm.slane %v563, 6
        %v776 = vperm.slane %v564, 6
        %v777 = vmul.f32 %v771, %v775
        %v778 = vmul.f32 %v773, %v776
        %v779 = vmul.f32 %v772, %v775
        %v780 = vmul.f32 %v774, %v776
        %781 = vset.pattern.permute.xlu0 6
        %782 = vperm.xlu0 %781, %v561
        %v783 = vpop.permute.xlu0 %782
        %785 = vset.pattern.permute.xlu0 6
        %786 = vperm.xlu0 %785, %v562
        %v787 = vpop.permute.xlu0 %786
        %v789 = vmul.f32 %v777, %v783
        %v790 = vmul.f32 %v778, %v783
        %v791 = vmul.f32 %v779, %v787
        %v792 = vmul.f32 %v780, %v787
        %v793 = vadd.f32 %v758, %v789
        %v794 = vadd.f32 %v759, %v790
        %v795 = vadd.f32 %v760, %v791
        %v796 = vadd.f32 %v761, %v792
        %797 = vrot.lane.b32.xlu0 %v557, 112
        %v798 = vpop.permute.xlu0 %797
        %799 = vrot.lane.b32.xlu0 %v559, 112
        %v800 = vpop.permute.xlu0 %799
        %801 = vrot.lane.b32.xlu0 %v558, 112
        %v802 = vpop.permute.xlu0 %801
        %803 = vrot.lane.b32.xlu0 %v560, 112
        %v804 = vpop.permute.xlu0 %803
        %vm805 = vcmp.lt.s32.totalorder %v576, 112
        %v806 = vsel %vm805, %v798, %v802
        %v807 = vsel %vm805, %v800, %v804
        %v808 = vsel %vm805, %v802, %v798
        %v809 = vsel %vm805, %v804, %v800
        %v810 = vperm.slane %v563, 7
        %v811 = vperm.slane %v564, 7
        %v812 = vmul.f32 %v806, %v810
        %v813 = vmul.f32 %v808, %v811
        %v814 = vmul.f32 %v807, %v810
        %v815 = vmul.f32 %v809, %v811
        %816 = vset.pattern.permute.xlu0 7
        %817 = vperm.xlu0 %816, %v561
        %v818 = vpop.permute.xlu0 %817
        %820 = vset.pattern.permute.xlu0 7
        %821 = vperm.xlu0 %820, %v562
        %v822 = vpop.permute.xlu0 %821
        %v824 = vmul.f32 %v812, %v818
        %v825 = vmul.f32 %v813, %v818
        %v826 = vmul.f32 %v814, %v822
        %v827 = vmul.f32 %v815, %v822
        %v828 = vadd.f32 %v793, %v824
        %v829 = vadd.f32 %v794, %v825
        %v830 = vadd.f32 %v795, %v826
        %v831 = vadd.f32 %v796, %v827
        %832 = vrot.lane.b32.xlu0 %v557, 111
        %v833 = vpop.permute.xlu0 %832
        %834 = vrot.lane.b32.xlu0 %v559, 111
        %v835 = vpop.permute.xlu0 %834
        %836 = vrot.lane.b32.xlu0 %v558, 111
        %v837 = vpop.permute.xlu0 %836
        %838 = vrot.lane.b32.xlu0 %v560, 111
        %v839 = vpop.permute.xlu0 %838
        %vm840 = vcmp.lt.s32.totalorder %v576, 111
        %v841 = vsel %vm840, %v833, %v837
        %v842 = vsel %vm840, %v835, %v839
        %v843 = vsel %vm840, %v837, %v833
        %v844 = vsel %vm840, %v839, %v835
        %v845 = vperm.slane %v565, 0
        %v846 = vperm.slane %v566, 0
        %v847 = vmul.f32 %v841, %v845
        %v848 = vmul.f32 %v843, %v846
        %v849 = vmul.f32 %v842, %v845
        %v850 = vmul.f32 %v844, %v846
        %851 = vset.pattern.permute.xlu0 8
        %852 = vperm.xlu0 %851, %v561
        %v853 = vpop.permute.xlu0 %852
        %855 = vset.pattern.permute.xlu0 8
        %856 = vperm.xlu0 %855, %v562
        %v857 = vpop.permute.xlu0 %856
        %v859 = vmul.f32 %v847, %v853
        %v860 = vmul.f32 %v848, %v853
        %v861 = vmul.f32 %v849, %v857
        %v862 = vmul.f32 %v850, %v857
        %v863 = vadd.f32 %v828, %v859
        %v864 = vadd.f32 %v829, %v860
        %v865 = vadd.f32 %v830, %v861
        %v866 = vadd.f32 %v831, %v862
        %v867 = vmul.f32 %v863, 0.5
        %v868 = vmul.f32 %v864, 0.5
        %v869 = vmul.f32 %v863, 0.70710677
        %v870 = vmul.f32 %v864, 0.70710677
        %v871 = vand.u32 2147483647, %v869
        %v872 = vand.u32 2147483647, %v870
        %v873 = vmul.f32 %v871, 0.3275911
        %v874 = vmul.f32 %v872, 0.3275911
        %v875 = vadd.f32 %v873, 1.0
        %v876 = vadd.f32 %v874, 1.0
        %v877 = vrcp.pop %v875
        %v878 = vmul.f32 %v875, %v877
        %v879 = vsub.f32 1.0, %v878
        %v880 = vmul.f32 %v877, %v879
        %v881 = vadd.f32 %v877, %v880
        %vm882 = vweird.f32 %v875
        %vm883 = vweird.f32 %v877
        %vm884 = vmor %vm882, %vm883
        %v885 = vsel %vm884, %v877, %v881
        %v886 = vand.u32 2147483647, %v875
        %vm887 = vcmp.eq.f32.partialorder %v886, 8.507059e+37
        %v888 = vand.u32 %v875, 2147483648
        %v889 = vor.u32 1.1754944e-38, %v888
        %v890 = vsel %vm887, %v889, %v885
        %v891 = vmul.f32 1.0, %v890
        %v892 = vrcp.pop %v876
        %v893 = vmul.f32 %v876, %v892
        %v894 = vsub.f32 1.0, %v893
        %v895 = vmul.f32 %v892, %v894
        %v896 = vadd.f32 %v892, %v895
        %vm897 = vweird.f32 %v876
        %vm898 = vweird.f32 %v892
        %vm899 = vmor %vm897, %vm898
        %v900 = vsel %vm899, %v892, %v896
        %v901 = vand.u32 2147483647, %v876
        %vm902 = vcmp.eq.f32.partialorder %v901, 8.507059e+37
        %v903 = vand.u32 %v876, 2147483648
        %v904 = vor.u32 1.1754944e-38, %v903
        %v905 = vsel %vm902, %v904, %v900
        %v906 = vmul.f32 1.0, %v905
        %v907 = vmul.f32 %v891, 1.0614054
        %v908 = vmul.f32 %v906, 1.0614054
        %v909 = vadd.f32 %v907, -1.4531521
        %v910 = vadd.f32 %v908, -1.4531521
        %v911 = vmul.f32 %v909, %v891
        %v912 = vmul.f32 %v910, %v906
        %v913 = vadd.f32 %v911, 1.4214138
        %v914 = vadd.f32 %v912, 1.4214138
        %v915 = vmul.f32 %v913, %v891
        %v916 = vmul.f32 %v914, %v906
        %v917 = vadd.f32 %v915, -0.28449672
        %v918 = vadd.f32 %v916, -0.28449672
        %v919 = vmul.f32 %v917, %v891
        %v920 = vmul.f32 %v918, %v906
        %v921 = vadd.f32 %v919, 0.2548296
        %v922 = vadd.f32 %v920, 0.2548296
        %v923 = vmul.f32 %v921, %v891
        %v924 = vmul.f32 %v922, %v906
        %v925 = vsub.f32 0.0, %v871
        %v926 = vsub.f32 0.0, %v872
        %v927 = vmul.f32 %v925, %v871
        %v928 = vmul.f32 %v926, %v872
        %v929 = vmul.f32 %v927, 1.442695
        %v930 = vpow.pop %v929
        %v931 = vmul.f32 %v928, 1.442695
        %v932 = vpow.pop %v931
        %v933 = vmul.f32 %v923, %v930
        %v934 = vmul.f32 %v924, %v932
        %v935 = vsub.f32 1.0, %v933
        %v936 = vsub.f32 1.0, %v934
        %vm937 = vcmp.ge.f32.partialorder %v869, 0.0
        %vm938 = vcmp.ge.f32.partialorder %v870, 0.0
        %v939 = vsub.f32 0.0, %v935
        %v940 = vsub.f32 0.0, %v936
        %v941 = vsel %vm937, %v935, %v939
        %v942 = vsel %vm938, %v936, %v940
        %v943 = vadd.f32 %v941, 1.0
        %v944 = vadd.f32 %v942, 1.0
        %v945 = vmul.f32 %v867, %v943
        %v946 = vmul.f32 %v868, %v944
        %vm951 = vcmask 1042432
        %v952 = vrot.slane %v863, 5
        %v953 = vrot.slane %v865, 5
        %v954 = vsel %vm951, %v952, %v953
        %v955 = vrot.slane %v864, 5
        %v956 = vrot.slane %v866, 5
        %v957 = vsel %vm951, %v955, %v956
        %v960 = vmul.f32 %v945, %v954
        %v961 = vmul.f32 %v946, %v957
        %v962 = vld [vmem:[%s345] sm:$0xf]
        %964 = vset.pattern.permute.xlu0 0
        %965 = vperm.xlu0 %964, %v962
        %v966 = vpop.permute.xlu0 %965
        %v968 = vperm.slane %v960, 0
        %v969 = vperm.slane %v961, 0
        %v970 = vmul.f32 %v966, %v968
        %v971 = vmul.f32 %v966, %v969
        %v972 = vadd.f32 %v970, 0.0
        %v973 = vadd.f32 %v971, 0.0
        %974 = vset.pattern.permute.xlu0 1
        %975 = vperm.xlu0 %974, %v962
        %v976 = vpop.permute.xlu0 %975
        %v978 = vperm.slane %v960, 1
        %v979 = vperm.slane %v961, 1
        %v980 = vmul.f32 %v976, %v978
        %v981 = vmul.f32 %v976, %v979
        %v982 = vadd.f32 %v972, %v980
        %v983 = vadd.f32 %v973, %v981
        %984 = vset.pattern.permute.xlu0 2
        %985 = vperm.xlu0 %984, %v962
        %v986 = vpop.permute.xlu0 %985
        %v988 = vperm.slane %v960, 2
        %v989 = vperm.slane %v961, 2
        %v990 = vmul.f32 %v986, %v988
        %v991 = vmul.f32 %v986, %v989
        %v992 = vadd.f32 %v982, %v990
        %v993 = vadd.f32 %v983, %v991
        %994 = vset.pattern.permute.xlu0 3
        %995 = vperm.xlu0 %994, %v962
        %v996 = vpop.permute.xlu0 %995
        %v998 = vperm.slane %v960, 3
        %v999 = vperm.slane %v961, 3
        %v1000 = vmul.f32 %v996, %v998
        %v1001 = vmul.f32 %v996, %v999
        %v1002 = vadd.f32 %v992, %v1000
        %v1003 = vadd.f32 %v993, %v1001
        %1004 = vset.pattern.permute.xlu0 4
        %1005 = vperm.xlu0 %1004, %v962
        %v1006 = vpop.permute.xlu0 %1005
        %v1008 = vperm.slane %v960, 4
        %v1009 = vperm.slane %v961, 4
        %v1010 = vmul.f32 %v1006, %v1008
        %v1011 = vmul.f32 %v1006, %v1009
        %v1012 = vadd.f32 %v1002, %v1010
        %v1013 = vadd.f32 %v1003, %v1011
        %v1014 = vld [vmem:[%s326] sm:$0xff]
        %v1017 = vrot.slane %v1013, 4
        %vm1018 = vcmask 1043456
        %v1019 = vsel %vm1018, %v1012, %v1017
        %v1021 = vadd.f32 %v1014, %v1019
        %1022 = vst [vmem:[%s326] sm:$0xff] %v1021
        %s1023 = sand.u32 %s208, 1
        %s1024 = scalar_lea.sflag [#allocation4], %s1023
        %s1025 = sand.u32 %s208, 1
        %s1026 = smul.addr %s1025, 8
        %s1027 = scalar_lea.vmem [#allocation3], %s1026
        // Predicated region
        $region53: #{tpu_custom_call.1} parent=47 // pred_check
          %p1028 = pneg %p218
        $region54: #{tpu_custom_call.1} parent=47 // pred_check_branch
          %1030 = sbr.rel (%p1028) target = $region56
        $region55: #{tpu_custom_call.1} parent=47 // pred_region
          %1032 = vsyncadd %s1024, 0
          %s1033 = smul.addr %s25, 2
          %s1034 = smul.addr %s1033, 4
          %s1035 = scalar_lea.hbm %s7, %s1034
          %s1037 = sshll.u32 %s1027, 4
          %s1038 = int_to_ptr.vmem [resolvable:$true] %s1037
          %s1039 = sshll.u32 %s1035, 4
          %s1040 = int_to_ptr.hbm [resolvable:$true] %s1039
          %1042 = dma.vmem_to_hbm [thread:$0]  %s1038, 128, %s1040, %s1024
        $region56: #{tpu_custom_call.1} parent=47 // pred_fallthru
          _
      $region48: #{tpu_custom_call.1} parent=5 // pred_fallthru
        _
      %p1043 = scmp.le.s32.totalorder 2, %s16
      // Predicated region
      $region57: #{tpu_custom_call.1} parent=5 // pred_check
        %p1044 = pneg %p1043
      $region58: #{tpu_custom_call.1} parent=5 // pred_check_branch
        %1046 = sbr.rel (%p1044) target = $region60
      $region59: #{tpu_custom_call.1} parent=5 // pred_region
        %s1047 = ssub.s32 %s16, 2
        // Predicated region
        $region61: #{tpu_custom_call.1} parent=59 // pred_check
          %p1048 = pneg %p224
        $region62: #{tpu_custom_call.1} parent=59 // pred_check_branch
          %1050 = sbr.rel (%p1048) target = $region64
        $region63: #{tpu_custom_call.1} parent=59 // pred_region
          %s1051 = sand.u32 %s209, 1
          %s1052 = scalar_lea.sflag [#allocation4], %s1051
          %s1053 = sand.u32 %s209, 1
          %s1054 = smul.addr %s1053, 8
          %s1055 = scalar_lea.vmem [#allocation3], %s1054
          %1057 = dma.done %s1052, 128
        $region64: #{tpu_custom_call.1} parent=59 // pred_fallthru
          _
      $region60: #{tpu_custom_call.1} parent=5 // pred_fallthru
        _
    $region6: #{tpu_custom_call.1} parent=1 // loop_footer
      %s20 = sadd.s32 1, %s16
    $region7: #{tpu_custom_call.1} parent=1 // loop_footer_branch
      %15 = sbr.rel target = $region3
    $region8: #{tpu_custom_call.1} parent=1 // loop_exit
      _
    %1058 = vsyncpa [#allocation4], 1
    %s1059 = scalar_lea.sflag [#allocation4], 1
    %1060 = vsyncpa %s1059, 1

</llo_original>
